<compile_context>
chip_gen: v7x
topology: tpu7x:2x2x1
jax: 0.10.0
libtpu: 0.0.40
codegen_flags: <defaults>
</compile_context>

<pallas_src>
import functools

import jax
import jax.numpy as jnp
from jax.experimental import pallas as pl
from jax.experimental.pallas import tpu as pltpu

A_PAD = 128        # lane-dense padded width of the mu / log_std projections
BATCH_TILE = 256   # batch tile once the batch is big enough to grid over


def actor_trunk_kernel(x_ref, w1_ref, b1_ref, w2_ref, b2_ref,
                       wmu_ref, bmu_ref, wls_ref, bls_ref,
                       mu_ref, std_ref, *, log_std_min, log_std_max):
    # trunk = Linear(F,H) -> ReLU -> Linear(H,H) -> ReLU -> Linear(H, 2A)
    # (hidden_depth = 2), with the last Linear pre-split into mu / log_std.
    x = x_ref[...].astype(jnp.bfloat16)
    h = jnp.dot(x, w1_ref[...], preferred_element_type=jnp.float32) + b1_ref[...]
    h = jnp.maximum(h, 0.0).astype(jnp.bfloat16)
    h = jnp.dot(h, w2_ref[...], preferred_element_type=jnp.float32) + b2_ref[...]
    h = jnp.maximum(h, 0.0).astype(jnp.bfloat16)

    mu = jnp.dot(h, wmu_ref[...], preferred_element_type=jnp.float32) + bmu_ref[...]
    ls = jnp.dot(h, wls_ref[...], preferred_element_type=jnp.float32) + bls_ref[...]

    # log_std squashing + std = exp(log_std)   (f32; tanh/exp run on the EUP)
    ls = jnp.tanh(ls)
    ls = log_std_min + 0.5 * (log_std_max - log_std_min) * (ls + 1.0)

    mu_ref[...] = mu
    std_ref[...] = jnp.exp(ls)


@functools.partial(jax.jit, static_argnames=("action_dim", "log_std_bounds"))
def actor_forward(obs, params, *, action_dim, log_std_bounds=(-10.0, 2.0)):
    """Returns (mu, std): the parameters of the SquashedNormal the Actor builds."""
    w1, b1, w2, b2, wmu, bmu, wls, bls = params
    B, F = obs.shape
    apad = wmu.shape[1]

    # Batch tiling: full-batch single block when small, 256-row tiles when big.
    bm = B if B <= BATCH_TILE else BATCH_TILE
    pad = (-B) % bm
    x = jnp.pad(obs, ((0, pad), (0, 0))) if pad else obs
    bp = B + pad
    grid = (bp // bm,)

    def full(arr):  # whole-array block, resident in VMEM every grid step
        return pl.BlockSpec(arr.shape, lambda i: (0, 0))

    in_specs = [pl.BlockSpec((bm, F), lambda i: (i, 0)),
                full(w1), full(b1), full(w2), full(b2),
                full(wmu), full(bmu), full(wls), full(bls)]
    out_specs = (pl.BlockSpec((bm, apad), lambda i: (i, 0)),
                 pl.BlockSpec((bm, apad), lambda i: (i, 0)))
    out_shape = (jax.ShapeDtypeStruct((bp, apad), jnp.float32),
                 jax.ShapeDtypeStruct((bp, apad), jnp.float32))

    kernel = functools.partial(actor_trunk_kernel,
                               log_std_min=float(log_std_bounds[0]),
                               log_std_max=float(log_std_bounds[1]))

    mu_pad, std_pad = pl.pallas_call(
        kernel,
        out_shape=out_shape,
        grid=grid,
        in_specs=in_specs,
        out_specs=out_specs,
        compiler_params=pltpu.CompilerParams(
            dimension_semantics=("parallel",)),   # v7x: 2 TCs split the batch
    )(x, w1, b1, w2, b2, wmu, bmu, wls, bls)

    return mu_pad[:B, :action_dim], std_pad[:B, :action_dim]


def init_params(key, feature_dim, hidden_dim, action_dim):
    """PyTorch-style Linear init, laid out as (in, out); weights cast to bf16."""
    ks = jax.random.split(key, 3)

    def lin(k, fan_in, fan_out):
        bound = 1.0 / float(fan_in) ** 0.5
        kw, kb = jax.random.split(k)
        w = jax.random.uniform(kw, (fan_in, fan_out), jnp.float32, -bound, bound)
        b = jax.random.uniform(kb, (1, fan_out), jnp.float32, -bound, bound)
        return w, b

    w1, b1 = lin(ks[0], feature_dim, hidden_dim)
    w2, b2 = lin(ks[1], hidden_dim, hidden_dim)
    w3, b3 = lin(ks[2], hidden_dim, 2 * action_dim)

    # Fold .chunk(2, dim=-1) into the parameters: split the last Linear into
    # mu / log_std halves and pad each to a lane-dense width of A_PAD.
    pad = A_PAD - action_dim
    wmu = jnp.pad(w3[:, :action_dim], ((0, 0), (0, pad)))
    wls = jnp.pad(w3[:, action_dim:], ((0, 0), (0, pad)))
    bmu = jnp.pad(b3[:, :action_dim], ((0, 0), (0, pad)))
    bls = jnp.pad(b3[:, action_dim:], ((0, 0), (0, pad)))

    cast = lambda w: w.astype(jnp.bfloat16)   # weights bf16, biases stay f32
    return (cast(w1), b1, cast(w2), b2, cast(wmu), bmu, cast(wls), bls)


def reference_forward(obs, params, action_dim, log_std_bounds=(-10.0, 2.0)):
    """Plain-JAX reference with the same bf16-weight / f32-accumulate math."""
    w1, b1, w2, b2, wmu, bmu, wls, bls = params
    bf = jnp.bfloat16
    h = jnp.dot(obs.astype(bf), w1, preferred_element_type=jnp.float32) + b1
    h = jnp.maximum(h, 0.0).astype(bf)
    h = jnp.dot(h, w2, preferred_element_type=jnp.float32) + b2
    h = jnp.maximum(h, 0.0).astype(bf)
    mu = jnp.dot(h, wmu, preferred_element_type=jnp.float32) + bmu
    ls = jnp.dot(h, wls, preferred_element_type=jnp.float32) + bls
    ls = jnp.tanh(ls)
    lo, hi = log_std_bounds
    ls = lo + 0.5 * (hi - lo) * (ls + 1.0)
    return mu[:, :action_dim], jnp.exp(ls)[:, :action_dim]


if __name__ == "__main__":
    key = jax.random.PRNGKey(0)
    k_obs, k_big, k_p = jax.random.split(key, 3)

    feature_dim, hidden_dim, action_dim = 32, 128, 6
    log_std_bounds = (-10.0, 2.0)
    params = init_params(k_p, feature_dim, hidden_dim, action_dim)

    # Small batch: single full-batch block (no grid overhead).
    obs = jax.random.normal(k_obs, (8, feature_dim), jnp.float32)
    mu, std = actor_forward(obs, params, action_dim=action_dim,
                            log_std_bounds=log_std_bounds)
    mu, std = jax.block_until_ready((mu, std))
    mu_r, std_r = reference_forward(obs, params, action_dim, log_std_bounds)
    assert mu.shape == (8, action_dim) and std.shape == (8, action_dim)
    assert jnp.allclose(mu, mu_r, atol=1e-3, rtol=1e-3), "mu mismatch (small batch)"
    assert jnp.allclose(std, std_r, atol=1e-3, rtol=1e-3), "std mismatch (small batch)"
    assert bool(jnp.all(std > 0.0))

    # Large batch: exercises the 256-row batch grid with parallel semantics.
    obs_big = jax.random.normal(k_big, (512, feature_dim), jnp.float32)
    mu_b, std_b = actor_forward(obs_big, params, action_dim=action_dim,
                                log_std_bounds=log_std_bounds)
    mu_b, std_b = jax.block_until_ready((mu_b, std_b))
    mu_br, std_br = reference_forward(obs_big, params, action_dim, log_std_bounds)
    assert jnp.allclose(mu_b, mu_br, atol=1e-3, rtol=1e-3), "mu mismatch (big batch)"
    assert jnp.allclose(std_b, std_br, atol=1e-3, rtol=1e-3), "std mismatch (big batch)"

    print("KERNEL_OK")
</pallas_src>

<mosaic_0001>
module attributes {stable_mosaic.version = 11 : i64} {
  func.func @actor_trunk_kernel(%arg0: i32, %arg1: memref<8x32xf32, #tpu.memory_space<vmem>>, %arg2: memref<32x128xbf16, #tpu.memory_space<vmem>>, %arg3: memref<1x128xf32, #tpu.memory_space<vmem>>, %arg4: memref<128x128xbf16, #tpu.memory_space<vmem>>, %arg5: memref<1x128xf32, #tpu.memory_space<vmem>>, %arg6: memref<128x128xbf16, #tpu.memory_space<vmem>>, %arg7: memref<1x128xf32, #tpu.memory_space<vmem>>, %arg8: memref<128x128xbf16, #tpu.memory_space<vmem>>, %arg9: memref<1x128xf32, #tpu.memory_space<vmem>>, %arg10: memref<8x128xf32, #tpu.memory_space<vmem>>, %arg11: memref<8x128xf32, #tpu.memory_space<vmem>>) attributes {dimension_semantics = [#tpu.dimension_semantics<parallel>], iteration_bounds = array<i64: 1>, scalar_prefetch = 0 : i64, scratch_operands = 0 : i64, tpu.core_type = #tpu.core_type<tc>, window_params = [{transform_indices = @transform_0, window_bounds = array<i64: 8, 32>}, {pipeline_mode = #tpu.pipeline_mode<synchronous>, transform_indices = @transform_1, window_bounds = array<i64: 32, 128>}, {pipeline_mode = #tpu.pipeline_mode<synchronous>, transform_indices = @transform_2, window_bounds = array<i64: 1, 128>}, {pipeline_mode = #tpu.pipeline_mode<synchronous>, transform_indices = @transform_3, window_bounds = array<i64: 128, 128>}, {pipeline_mode = #tpu.pipeline_mode<synchronous>, transform_indices = @transform_4, window_bounds = array<i64: 1, 128>}, {pipeline_mode = #tpu.pipeline_mode<synchronous>, transform_indices = @transform_5, window_bounds = array<i64: 128, 128>}, {pipeline_mode = #tpu.pipeline_mode<synchronous>, transform_indices = @transform_6, window_bounds = array<i64: 1, 128>}, {pipeline_mode = #tpu.pipeline_mode<synchronous>, transform_indices = @transform_7, window_bounds = array<i64: 128, 128>}, {pipeline_mode = #tpu.pipeline_mode<synchronous>, transform_indices = @transform_8, window_bounds = array<i64: 1, 128>}, {transform_indices = @transform_9, window_bounds = array<i64: 8, 128>}, {transform_indices = @transform_10, window_bounds = array<i64: 8, 128>}]} {
    %c0 = arith.constant 0 : index
    %c0_0 = arith.constant 0 : index
    %0 = vector.load %arg1[%c0, %c0_0] : memref<8x32xf32, #tpu.memory_space<vmem>>, vector<8x32xf32>
    %1 = arith.truncf %0 : vector<8x32xf32> to vector<8x32xbf16>
    %c0_1 = arith.constant 0 : index
    %c0_2 = arith.constant 0 : index
    %2 = vector.load %arg2[%c0_1, %c0_2] : memref<32x128xbf16, #tpu.memory_space<vmem>>, vector<32x128xbf16>
    %cst = arith.constant dense<0.000000e+00> : vector<8x128xf32>
    %3 = tpu.matmul %1, %2, %cst {dimension_numbers = #tpu.dot_dimension_numbers<[1], [0], [0], [1], [0, 0, 1, 1], [], []>} : vector<8x32xbf16>, vector<32x128xbf16>, vector<8x128xf32> -> vector<8x128xf32>
    %c0_3 = arith.constant 0 : index
    %c0_4 = arith.constant 0 : index
    %4 = vector.load %arg3[%c0_3, %c0_4] : memref<1x128xf32, #tpu.memory_space<vmem>>, vector<1x128xf32>
    %5 = vector.broadcast %4 : vector<1x128xf32> to vector<8x128xf32>
    %6 = arith.addf %3, %5 : vector<8x128xf32>
    %cst_5 = arith.constant 0.000000e+00 : f32
    %7 = vector.broadcast %cst_5 : f32 to vector<8x128xf32>
    %8 = arith.maximumf %6, %7 : vector<8x128xf32>
    %9 = arith.truncf %8 : vector<8x128xf32> to vector<8x128xbf16>
    %c0_6 = arith.constant 0 : index
    %c0_7 = arith.constant 0 : index
    %10 = vector.load %arg4[%c0_6, %c0_7] : memref<128x128xbf16, #tpu.memory_space<vmem>>, vector<128x128xbf16>
    %cst_8 = arith.constant dense<0.000000e+00> : vector<8x128xf32>
    %11 = tpu.matmul %9, %10, %cst_8 {dimension_numbers = #tpu.dot_dimension_numbers<[1], [0], [0], [1], [0, 0, 1, 1], [], []>} : vector<8x128xbf16>, vector<128x128xbf16>, vector<8x128xf32> -> vector<8x128xf32>
    %c0_9 = arith.constant 0 : index
    %c0_10 = arith.constant 0 : index
    %12 = vector.load %arg5[%c0_9, %c0_10] : memref<1x128xf32, #tpu.memory_space<vmem>>, vector<1x128xf32>
    %13 = vector.broadcast %12 : vector<1x128xf32> to vector<8x128xf32>
    %14 = arith.addf %11, %13 : vector<8x128xf32>
    %cst_11 = arith.constant 0.000000e+00 : f32
    %15 = vector.broadcast %cst_11 : f32 to vector<8x128xf32>
    %16 = arith.maximumf %14, %15 : vector<8x128xf32>
    %17 = arith.truncf %16 : vector<8x128xf32> to vector<8x128xbf16>
    %c0_12 = arith.constant 0 : index
    %c0_13 = arith.constant 0 : index
    %18 = vector.load %arg6[%c0_12, %c0_13] : memref<128x128xbf16, #tpu.memory_space<vmem>>, vector<128x128xbf16>
    %cst_14 = arith.constant dense<0.000000e+00> : vector<8x128xf32>
    %19 = tpu.matmul %17, %18, %cst_14 {dimension_numbers = #tpu.dot_dimension_numbers<[1], [0], [0], [1], [0, 0, 1, 1], [], []>} : vector<8x128xbf16>, vector<128x128xbf16>, vector<8x128xf32> -> vector<8x128xf32>
    %c0_15 = arith.constant 0 : index
    %c0_16 = arith.constant 0 : index
    %20 = vector.load %arg7[%c0_15, %c0_16] : memref<1x128xf32, #tpu.memory_space<vmem>>, vector<1x128xf32>
    %21 = vector.broadcast %20 : vector<1x128xf32> to vector<8x128xf32>
    %22 = arith.addf %19, %21 : vector<8x128xf32>
    %c0_17 = arith.constant 0 : index
    %c0_18 = arith.constant 0 : index
    %23 = vector.load %arg8[%c0_17, %c0_18] : memref<128x128xbf16, #tpu.memory_space<vmem>>, vector<128x128xbf16>
    %cst_19 = arith.constant dense<0.000000e+00> : vector<8x128xf32>
    %24 = tpu.matmul %17, %23, %cst_19 {dimension_numbers = #tpu.dot_dimension_numbers<[1], [0], [0], [1], [0, 0, 1, 1], [], []>} : vector<8x128xbf16>, vector<128x128xbf16>, vector<8x128xf32> -> vector<8x128xf32>
    %c0_20 = arith.constant 0 : index
    %c0_21 = arith.constant 0 : index
    %25 = vector.load %arg9[%c0_20, %c0_21] : memref<1x128xf32, #tpu.memory_space<vmem>>, vector<1x128xf32>
    %26 = vector.broadcast %25 : vector<1x128xf32> to vector<8x128xf32>
    %27 = arith.addf %24, %26 : vector<8x128xf32>
    %28 = math.tanh %27 : vector<8x128xf32>
    %cst_22 = arith.constant 1.000000e+00 : f32
    %29 = vector.broadcast %cst_22 : f32 to vector<8x128xf32>
    %30 = arith.addf %28, %29 : vector<8x128xf32>
    %cst_23 = arith.constant 6.000000e+00 : f32
    %31 = vector.broadcast %cst_23 : f32 to vector<8x128xf32>
    %32 = arith.mulf %31, %30 : vector<8x128xf32>
    %cst_24 = arith.constant -1.000000e+01 : f32
    %33 = vector.broadcast %cst_24 : f32 to vector<8x128xf32>
    %34 = arith.addf %33, %32 : vector<8x128xf32>
    %c0_25 = arith.constant 0 : index
    %c0_26 = arith.constant 0 : index
    %35 = vector.load %arg10[%c0_25, %c0_26] : memref<8x128xf32, #tpu.memory_space<vmem>>, vector<8x128xf32>
    tpu.vector_store %arg10[%c0_25, %c0_26], %22 {strides = array<i32>} : memref<8x128xf32, #tpu.memory_space<vmem>>, vector<8x128xf32>,
    %36 = math.exp %34 : vector<8x128xf32>
    %c0_27 = arith.constant 0 : index
    %c0_28 = arith.constant 0 : index
    %37 = vector.load %arg11[%c0_27, %c0_28] : memref<8x128xf32, #tpu.memory_space<vmem>>, vector<8x128xf32>
    tpu.vector_store %arg11[%c0_27, %c0_28], %36 {strides = array<i32>} : memref<8x128xf32, #tpu.memory_space<vmem>>, vector<8x128xf32>,
    return
  }
  func.func @transform_0(%arg0: i32) -> (i32, i32) {
    %c0_i32 = arith.constant 0 : i32
    %c0_i32_0 = arith.constant 0 : i32
    return %arg0, %c0_i32 : i32, i32
  }
  func.func @transform_1(%arg0: i32) -> (i32, i32) {
    %c0_i32 = arith.constant 0 : i32
    %c0_i32_0 = arith.constant 0 : i32
    %c0_i32_1 = arith.constant 0 : i32
    return %c0_i32, %c0_i32_0 : i32, i32
  }
  func.func @transform_2(%arg0: i32) -> (i32, i32) {
    %c0_i32 = arith.constant 0 : i32
    %c0_i32_0 = arith.constant 0 : i32
    %c0_i32_1 = arith.constant 0 : i32
    return %c0_i32, %c0_i32_0 : i32, i32
  }
  func.func @transform_3(%arg0: i32) -> (i32, i32) {
    %c0_i32 = arith.constant 0 : i32
    %c0_i32_0 = arith.constant 0 : i32
    %c0_i32_1 = arith.constant 0 : i32
    return %c0_i32, %c0_i32_0 : i32, i32
  }
  func.func @transform_4(%arg0: i32) -> (i32, i32) {
    %c0_i32 = arith.constant 0 : i32
    %c0_i32_0 = arith.constant 0 : i32
    %c0_i32_1 = arith.constant 0 : i32
    return %c0_i32, %c0_i32_0 : i32, i32
  }
  func.func @transform_5(%arg0: i32) -> (i32, i32) {
    %c0_i32 = arith.constant 0 : i32
    %c0_i32_0 = arith.constant 0 : i32
    %c0_i32_1 = arith.constant 0 : i32
    return %c0_i32, %c0_i32_0 : i32, i32
  }
  func.func @transform_6(%arg0: i32) -> (i32, i32) {
    %c0_i32 = arith.constant 0 : i32
    %c0_i32_0 = arith.constant 0 : i32
    %c0_i32_1 = arith.constant 0 : i32
    return %c0_i32, %c0_i32_0 : i32, i32
  }
  func.func @transform_7(%arg0: i32) -> (i32, i32) {
    %c0_i32 = arith.constant 0 : i32
    %c0_i32_0 = arith.constant 0 : i32
    %c0_i32_1 = arith.constant 0 : i32
    return %c0_i32, %c0_i32_0 : i32, i32
  }
  func.func @transform_8(%arg0: i32) -> (i32, i32) {
    %c0_i32 = arith.constant 0 : i32
    %c0_i32_0 = arith.constant 0 : i32
    %c0_i32_1 = arith.constant 0 : i32
    return %c0_i32, %c0_i32_0 : i32, i32
  }
  func.func @transform_9(%arg0: i32) -> (i32, i32) {
    %c0_i32 = arith.constant 0 : i32
    %c0_i32_0 = arith.constant 0 : i32
    return %arg0, %c0_i32 : i32, i32
  }
  func.func @transform_10(%arg0: i32) -> (i32, i32) {
    %c0_i32 = arith.constant 0 : i32
    %c0_i32_0 = arith.constant 0 : i32
    return %arg0, %c0_i32 : i32, i32
  }
}

</mosaic_0001>

<llo_original>
// kernel: actor_forward.1
$region0: #{actor_forward.1}
  #allocation0 [shape = 'u32[]', space=smem, size = 0x4, offset = 0x4, fixed_abs, tag = 'smem constant byte address 0x4 - core index']
  #allocation1 [shape = 'u32[144,128]{1,0:T(1,128)}', space=vmem, size = 0x12000, scoped, tag = 'internal scratch']
  %s0 = inlined_call_operand.hbm [shape: f32[8,32], index: 0, kind: input, shape index: {}]
  %s1 = inlined_call_operand.hbm [shape: bf16[32,128], index: 1, kind: input, shape index: {}]
  %s2 = inlined_call_operand.vmem [shape: f32[1,128], index: 2, kind: input, shape index: {}]
  %s3 = inlined_call_operand.hbm [shape: bf16[128,128], index: 3, kind: input, shape index: {}]
  %s4 = inlined_call_operand.vmem [shape: f32[1,128], index: 4, kind: input, shape index: {}]
  %s5 = inlined_call_operand.hbm [shape: bf16[128,128], index: 5, kind: input, shape index: {}]
  %s6 = inlined_call_operand.vmem [shape: f32[1,128], index: 6, kind: input, shape index: {}]
  %s7 = inlined_call_operand.hbm [shape: bf16[128,128], index: 7, kind: input, shape index: {}]
  %s8 = inlined_call_operand.vmem [shape: f32[1,128], index: 8, kind: input, shape index: {}]
  %s9 = inlined_call_operand.hbm [shape: f32[8,128], index: 9, kind: output, shape index: {0}]
  %s10 = inlined_call_operand.hbm [shape: f32[8,128], index: 10, kind: output, shape index: {1}]
  %11 = xla_tuple %s9, %s10
  %s12 = sld [smem:[#allocation0]]
  $region74: #{actor_forward.1} parent=0
    _
  %s14 = ssub.s32 1, %s12
  %s15 = scalar_select 0, %s14, %s12
  $region1: #{actor_forward.1} parent=0
    #allocation2 [shape = 'u8[4096]{0}', space=vmem, size = 0x1000, scoped, tag = 'input window, operand 0, single buffered']
    #allocation3 [shape = 's32[1]{0}', space=sflag, size = 0x4, scoped, tag = 'scoped memory for actor_forward.1']
    #allocation4 [shape = 's32[1]{0}', space=sflag, size = 0x4, scoped, tag = 'scoped memory for actor_forward.1']
    #allocation5 [shape = 'u8[8192]{0}', space=vmem, size = 0x2000, scoped, tag = 'input window, operand 1, single buffered']
    #allocation6 [shape = 's32[1]{0}', space=sflag, size = 0x4, scoped, tag = 'scoped memory for actor_forward.1']
    #allocation7 [shape = 'u8[32768]{0}', space=vmem, size = 0x8000, scoped, tag = 'input window, operand 3, single buffered']
    #allocation8 [shape = 'u8[32768]{0}', space=vmem, size = 0x8000, scoped, tag = 'input window, operand 5, single buffered']
    #allocation9 [shape = 's32[1]{0}', space=sflag, size = 0x4, scoped, tag = 'scoped memory for actor_forward.1']
    #allocation10 [shape = 'u8[32768]{0}', space=vmem, size = 0x8000, scoped, tag = 'input window, operand 7, single buffered']
    #allocation11 [shape = 'u8[4096]{0}', space=vmem, size = 0x1000, scoped, tag = 'output window, operand 0, single buffered']
    #allocation12 [shape = 'u8[4096]{0}', space=vmem, size = 0x1000, scoped, tag = 'output window, operand 1, single buffered']
    #allocation13 [shape = 's32[1]{0}', space=sflag, size = 0x4, scoped, tag = 'scoped memory for actor_forward.1']
    %16 = vsyncpa [#allocation3], 0
    %17 = vsyncpa [#allocation6], 0
    %18 = vsyncpa [#allocation9], 0
    %19 = vsyncpa [#allocation4], 0
    %20 = vsyncpa [#allocation13], 0
    // Predicated region
    $region2: #{actor_forward.1} parent=1 // pred_check
      _
    $region3: #{actor_forward.1} parent=1 // pred_check_branch
      %22 = sbr.rel (0) target = $region5
    $region4: #{actor_forward.1} parent=1 // pred_region
      %s24 = ssub.s32 128, 128
      %25 = vsyncadd [#allocation3], %s24
      %s27 = sshll.u32 [#allocation2], 4
      %s28 = int_to_ptr.vmem [resolvable:$true] %s27
      %30 = dma.hbm_to_vmem [thread:$0]  %s0, 128, %s28, [#allocation3]
    $region5: #{actor_forward.1} parent=1 // pred_fallthru
      _
    // Predicated region
    $region6: #{actor_forward.1} parent=1 // pred_check
      _
    $region7: #{actor_forward.1} parent=1 // pred_check_branch
      %32 = sbr.rel (0) target = $region9
    $region8: #{actor_forward.1} parent=1 // pred_region
      %s34 = ssub.s32 256, 256
      %35 = vsyncadd [#allocation6], %s34
      %s36 = sshll.u32 [#allocation5], 4
      %s37 = int_to_ptr.vmem [resolvable:$true] %s36
      %42 = dma.hbm_to_vmem [thread:$0]  %s1, 256, %s37, [#allocation6], 64, 64, 4
    $region9: #{actor_forward.1} parent=1 // pred_fallthru
      _
    // Predicated region
    $region10: #{actor_forward.1} parent=1 // pred_check
      _
    $region11: #{actor_forward.1} parent=1 // pred_check_branch
      %44 = sbr.rel (0) target = $region13
    $region12: #{actor_forward.1} parent=1 // pred_region
      _
    $region13: #{actor_forward.1} parent=1 // pred_fallthru
      _
    // Predicated region
    $region14: #{actor_forward.1} parent=1 // pred_check
      _
    $region15: #{actor_forward.1} parent=1 // pred_check_branch
      %46 = sbr.rel (0) target = $region17
    $region16: #{actor_forward.1} parent=1 // pred_region
      %s48 = ssub.s32 1024, 1024
      %49 = vsyncadd [#allocation6], %s48
      %s50 = sshll.u32 [#allocation7], 4
      %s51 = int_to_ptr.vmem [resolvable:$true] %s50
      %56 = dma.hbm_to_vmem [thread:$0]  %s3, 1024, %s51, [#allocation6], 64, 64, 4
    $region17: #{actor_forward.1} parent=1 // pred_fallthru
      _
    // Predicated region
    $region18: #{actor_forward.1} parent=1 // pred_check
      _
    $region19: #{actor_forward.1} parent=1 // pred_check_branch
      %58 = sbr.rel (0) target = $region21
    $region20: #{actor_forward.1} parent=1 // pred_region
      _
    $region21: #{actor_forward.1} parent=1 // pred_fallthru
      _
    // Predicated region
    $region22: #{actor_forward.1} parent=1 // pred_check
      _
    $region23: #{actor_forward.1} parent=1 // pred_check_branch
      %60 = sbr.rel (0) target = $region25
    $region24: #{actor_forward.1} parent=1 // pred_region
      %s62 = ssub.s32 1024, 1024
      %63 = vsyncadd [#allocation9], %s62
      %s64 = sshll.u32 [#allocation8], 4
      %s65 = int_to_ptr.vmem [resolvable:$true] %s64
      %70 = dma.hbm_to_vmem [thread:$0]  %s5, 1024, %s65, [#allocation9], 64, 64, 4
    $region25: #{actor_forward.1} parent=1 // pred_fallthru
      _
    // Predicated region
    $region26: #{actor_forward.1} parent=1 // pred_check
      _
    $region27: #{actor_forward.1} parent=1 // pred_check_branch
      %72 = sbr.rel (0) target = $region29
    $region28: #{actor_forward.1} parent=1 // pred_region
      _
    $region29: #{actor_forward.1} parent=1 // pred_fallthru
      _
    // Predicated region
    $region30: #{actor_forward.1} parent=1 // pred_check
      _
    $region31: #{actor_forward.1} parent=1 // pred_check_branch
      %74 = sbr.rel (0) target = $region33
    $region32: #{actor_forward.1} parent=1 // pred_region
      %s76 = ssub.s32 1024, 1024
      %77 = vsyncadd [#allocation9], %s76
      %s78 = sshll.u32 [#allocation10], 4
      %s79 = int_to_ptr.vmem [resolvable:$true] %s78
      %84 = dma.hbm_to_vmem [thread:$0]  %s7, 1024, %s79, [#allocation9], 64, 64, 4
    $region33: #{actor_forward.1} parent=1 // pred_fallthru
      _
    // Predicated region
    $region34: #{actor_forward.1} parent=1 // pred_check
      _
    $region35: #{actor_forward.1} parent=1 // pred_check_branch
      %86 = sbr.rel (0) target = $region37
    $region36: #{actor_forward.1} parent=1 // pred_region
      _
    $region37: #{actor_forward.1} parent=1 // pred_fallthru
      _
    // Predicated region
    $region38: #{actor_forward.1} parent=1 // pred_check
      _
    $region39: #{actor_forward.1} parent=1 // pred_check_branch
      %88 = sbr.rel (0) target = $region41
    $region40: #{actor_forward.1} parent=1 // pred_region
      %89 = dma.done [#allocation3], 128
    $region41: #{actor_forward.1} parent=1 // pred_fallthru
      _
    // Predicated region
    $region42: #{actor_forward.1} parent=1 // pred_check
      _
    $region43: #{actor_forward.1} parent=1 // pred_check_branch
      %91 = sbr.rel (0) target = $region45
    $region44: #{actor_forward.1} parent=1 // pred_region
      %92 = dma.done [#allocation6], 256
    $region45: #{actor_forward.1} parent=1 // pred_fallthru
      _
    // Predicated region
    $region46: #{actor_forward.1} parent=1 // pred_check
      _
    $region47: #{actor_forward.1} parent=1 // pred_check_branch
      %94 = sbr.rel (0) target = $region49
    $region48: #{actor_forward.1} parent=1 // pred_region
      %95 = dma.done [#allocation6], 1024
    $region49: #{actor_forward.1} parent=1 // pred_fallthru
      _
    // Predicated region
    $region50: #{actor_forward.1} parent=1 // pred_check
      _
    $region51: #{actor_forward.1} parent=1 // pred_check_branch
      %97 = sbr.rel (0) target = $region53
    $region52: #{actor_forward.1} parent=1 // pred_region
      %98 = dma.done [#allocation9], 1024
    $region53: #{actor_forward.1} parent=1 // pred_fallthru
      _
    // Predicated region
    $region54: #{actor_forward.1} parent=1 // pred_check
      _
    $region55: #{actor_forward.1} parent=1 // pred_check_branch
      %100 = sbr.rel (0) target = $region57
    $region56: #{actor_forward.1} parent=1 // pred_region
      %101 = dma.done [#allocation9], 1024
    $region57: #{actor_forward.1} parent=1 // pred_fallthru
      _
    %v103 = vld [vmem:[#allocation2] sm:$0xff]
    %v104 = vpack.c.bf16 %v103, %v103
    %v105 = vld [vmem:[#allocation5] sm:$0xf]
    %v106 = vld [vmem:[#allocation5 + $0x4] sm:$0xf]
    %v107 = vld [vmem:[#allocation5 + $0x8] sm:$0xf]
    %v108 = vld [vmem:[#allocation5 + $0xc] sm:$0xf]
    %v109 = vld [vmem:[%s2] sm:$0x1]
    %v111 = vlaneseq
    %v112 = vshrl.u32 %v111, 7
    %v113 = vsub.s32 0, %v112
    %v114 = vrot.slane %v109, %v113
    %v120 = vunpack.c.l.b16 %v105
    %v121 = vunpack.c.l.b16 %v106
    %v122 = vunpack.c.l.b16 %v107
    %v123 = vunpack.c.l.b16 %v108
    %v124 = vpack.c.b16 %v121, %v120
    %v125 = vpack.c.b16 %v123, %v122
    %vm128 = vcmask 261120
    %v130 = vsel %vm128, %v104, 0
    %132 = vmatprep.subr.bf16.mxu0 0
    %133 = vmatpush1.bf16.msra.mxu0 %v124
    %134 = vmatprep.subr.bf16.mxu0 0
    %135 = vmatpush1.bf16.msra.mxu0 %v125
    %136 = vmatprep.subr.bf16.mxu0 0
    %137 = vmatpush1.bf16.msra.mxu0 0
    %138 = vmatprep.subr.bf16.mxu0 0
    %139 = vmatpush1.bf16.msra.mxu0 0
    %140 = vmatprep.subr.bf16.mxu0 0
    %141 = vmatpush1.bf16.msra.mxu0 0
    %142 = vmatprep.subr.bf16.mxu0 0
    %143 = vmatpush1.bf16.msra.mxu0 0
    %144 = vmatprep.subr.bf16.mxu0 0
    %145 = vmatpush1.bf16.msra.mxu0 0
    %146 = vmatprep.subr.bf16.mxu0 0
    %147 = vmatpush1.bf16.msra.mxu0 0
    %148 = vmatprep.subr.bf16.mxu0 0
    %149 = vmatpush1.bf16.msra.mxu0 0
    %150 = vmatprep.subr.bf16.mxu0 0
    %151 = vmatpush1.bf16.msra.mxu0 0
    %152 = vmatprep.subr.bf16.mxu0 0
    %153 = vmatpush1.bf16.msra.mxu0 0
    %154 = vmatprep.subr.bf16.mxu0 0
    %155 = vmatpush1.bf16.msra.mxu0 0
    %156 = vmatprep.subr.bf16.mxu0 0
    %157 = vmatpush1.bf16.msra.mxu0 0
    %158 = vmatprep.subr.bf16.mxu0 0
    %159 = vmatpush1.bf16.msra.mxu0 0
    %160 = vmatprep.subr.bf16.mxu0 0
    %161 = vmatpush1.bf16.msra.mxu0 0
    %162 = vmatprep.subr.bf16.mxu0 0
    %163 = vmatpush1.bf16.msra.mxu0 0
    %164 = vmatprep.mubr.bf16.mxu0 0
    %165 = vmatmul.mubr.bf16.gmra.mrb[0].mxu0 %v130
    %v166 = vpop.f32.mrb[0].mxu0
    %v167 = vadd.f32 %v114, %v166
    %v168 = vpop.f32.mrb[0].mxu0
    %v169 = vpop.f32.mrb[0].mxu0
    %v170 = vpop.f32.mrb[0].mxu0
    %171 = vdwg.mxu0
    %v172 = vmax.f32 %v167, 0.0
    %v173 = vpack.c.bf16 %v172, %v172
    %v174 = vld [vmem:[#allocation7] sm:$0xf]
    %v175 = vld [vmem:[#allocation7 + $0x4] sm:$0xf]
    %v176 = vld [vmem:[#allocation7 + $0x8] sm:$0xf]
    %v177 = vld [vmem:[#allocation7 + $0xc] sm:$0xf]
    %v178 = vld [vmem:[#allocation7 + $0x10] sm:$0xf]
    %v179 = vld [vmem:[#allocation7 + $0x14] sm:$0xf]
    %v180 = vld [vmem:[#allocation7 + $0x18] sm:$0xf]
    %v181 = vld [vmem:[#allocation7 + $0x1c] sm:$0xf]
    %v182 = vld [vmem:[#allocation7 + $0x20] sm:$0xf]
    %v183 = vld [vmem:[#allocation7 + $0x24] sm:$0xf]
    %v184 = vld [vmem:[#allocation7 + $0x28] sm:$0xf]
    %v185 = vld [vmem:[#allocation7 + $0x2c] sm:$0xf]
    %v186 = vld [vmem:[#allocation7 + $0x30] sm:$0xf]
    %v187 = vld [vmem:[#allocation7 + $0x34] sm:$0xf]
    %v188 = vld [vmem:[#allocation7 + $0x38] sm:$0xf]
    %v189 = vld [vmem:[#allocation7 + $0x3c] sm:$0xf]
    %v190 = vld [vmem:[%s4] sm:$0x1]
    %v192 = vlaneseq
    %v193 = vshrl.u32 %v192, 7
    %v194 = vsub.s32 0, %v193
    %v195 = vrot.slane %v190, %v194
    %v213 = vunpack.c.l.b16 %v174
    %v214 = vunpack.c.l.b16 %v175
    %v215 = vunpack.c.l.b16 %v176
    %v216 = vunpack.c.l.b16 %v177
    %v217 = vunpack.c.l.b16 %v178
    %v218 = vunpack.c.l.b16 %v179
    %v219 = vunpack.c.l.b16 %v180
    %v220 = vunpack.c.l.b16 %v181
    %v221 = vunpack.c.l.b16 %v182
    %v222 = vunpack.c.l.b16 %v183
    %v223 = vunpack.c.l.b16 %v184
    %v224 = vunpack.c.l.b16 %v185
    %v225 = vunpack.c.l.b16 %v186
    %v226 = vunpack.c.l.b16 %v187
    %v227 = vunpack.c.l.b16 %v188
    %v228 = vunpack.c.l.b16 %v189
    %v229 = vpack.c.b16 %v214, %v213
    %v230 = vpack.c.b16 %v216, %v215
    %v231 = vpack.c.b16 %v218, %v217
    %v232 = vpack.c.b16 %v220, %v219
    %v233 = vpack.c.b16 %v222, %v221
    %v234 = vpack.c.b16 %v224, %v223
    %v235 = vpack.c.b16 %v226, %v225
    %v236 = vpack.c.b16 %v228, %v227
    %245 = vmatprep.subr.bf16.mxu0 0
    %246 = vmatpush1.bf16.msra.mxu0 %v229
    %247 = vmatprep.subr.bf16.mxu0 0
    %248 = vmatpush1.bf16.msra.mxu0 %v230
    %249 = vmatprep.subr.bf16.mxu0 0
    %250 = vmatpush1.bf16.msra.mxu0 %v231
    %251 = vmatprep.subr.bf16.mxu0 0
    %252 = vmatpush1.bf16.msra.mxu0 %v232
    %253 = vmatprep.subr.bf16.mxu0 0
    %254 = vmatpush1.bf16.msra.mxu0 %v233
    %255 = vmatprep.subr.bf16.mxu0 0
    %256 = vmatpush1.bf16.msra.mxu0 %v234
    %257 = vmatprep.subr.bf16.mxu0 0
    %258 = vmatpush1.bf16.msra.mxu0 %v235
    %259 = vmatprep.subr.bf16.mxu0 0
    %260 = vmatpush1.bf16.msra.mxu0 %v236
    %261 = vmatprep.subr.bf16.mxu0 0
    %262 = vmatpush1.bf16.msra.mxu0 0
    %263 = vmatprep.subr.bf16.mxu0 0
    %264 = vmatpush1.bf16.msra.mxu0 0
    %265 = vmatprep.subr.bf16.mxu0 0
    %266 = vmatpush1.bf16.msra.mxu0 0
    %267 = vmatprep.subr.bf16.mxu0 0
    %268 = vmatpush1.bf16.msra.mxu0 0
    %269 = vmatprep.subr.bf16.mxu0 0
    %270 = vmatpush1.bf16.msra.mxu0 0
    %271 = vmatprep.subr.bf16.mxu0 0
    %272 = vmatpush1.bf16.msra.mxu0 0
    %273 = vmatprep.subr.bf16.mxu0 0
    %274 = vmatpush1.bf16.msra.mxu0 0
    %275 = vmatprep.subr.bf16.mxu0 0
    %276 = vmatpush1.bf16.msra.mxu0 0
    %277 = vmatprep.mubr.bf16.mxu0 0
    %278 = vmatmul.mubr.bf16.gmra.mrb[0].mxu0 %v173
    %v279 = vpop.f32.mrb[0].mxu0
    %v280 = vadd.f32 %v195, %v279
    %v281 = vpop.f32.mrb[0].mxu0
    %v282 = vpop.f32.mrb[0].mxu0
    %v283 = vpop.f32.mrb[0].mxu0
    %284 = vdwg.mxu0
    %v285 = vmax.f32 %v280, 0.0
    %v286 = vpack.c.bf16 %v285, %v285
    %v287 = vld [vmem:[#allocation8] sm:$0xf]
    %v288 = vld [vmem:[#allocation8 + $0x4] sm:$0xf]
    %v289 = vld [vmem:[#allocation8 + $0x8] sm:$0xf]
    %v290 = vld [vmem:[#allocation8 + $0xc] sm:$0xf]
    %v291 = vld [vmem:[#allocation8 + $0x10] sm:$0xf]
    %v292 = vld [vmem:[#allocation8 + $0x14] sm:$0xf]
    %v293 = vld [vmem:[#allocation8 + $0x18] sm:$0xf]
    %v294 = vld [vmem:[#allocation8 + $0x1c] sm:$0xf]
    %v295 = vld [vmem:[#allocation8 + $0x20] sm:$0xf]
    %v296 = vld [vmem:[#allocation8 + $0x24] sm:$0xf]
    %v297 = vld [vmem:[#allocation8 + $0x28] sm:$0xf]
    %v298 = vld [vmem:[#allocation8 + $0x2c] sm:$0xf]
    %v299 = vld [vmem:[#allocation8 + $0x30] sm:$0xf]
    %v300 = vld [vmem:[#allocation8 + $0x34] sm:$0xf]
    %v301 = vld [vmem:[#allocation8 + $0x38] sm:$0xf]
    %v302 = vld [vmem:[#allocation8 + $0x3c] sm:$0xf]
    %v303 = vld [vmem:[%s6] sm:$0x1]
    %v305 = vlaneseq
    %v306 = vshrl.u32 %v305, 7
    %v307 = vsub.s32 0, %v306
    %v308 = vrot.slane %v303, %v307
    %v326 = vunpack.c.l.b16 %v287
    %v327 = vunpack.c.l.b16 %v288
    %v328 = vunpack.c.l.b16 %v289
    %v329 = vunpack.c.l.b16 %v290
    %v330 = vunpack.c.l.b16 %v291
    %v331 = vunpack.c.l.b16 %v292
    %v332 = vunpack.c.l.b16 %v293
    %v333 = vunpack.c.l.b16 %v294
    %v334 = vunpack.c.l.b16 %v295
    %v335 = vunpack.c.l.b16 %v296
    %v336 = vunpack.c.l.b16 %v297
    %v337 = vunpack.c.l.b16 %v298
    %v338 = vunpack.c.l.b16 %v299
    %v339 = vunpack.c.l.b16 %v300
    %v340 = vunpack.c.l.b16 %v301
    %v341 = vunpack.c.l.b16 %v302
    %v342 = vpack.c.b16 %v327, %v326
    %v343 = vpack.c.b16 %v329, %v328
    %v344 = vpack.c.b16 %v331, %v330
    %v345 = vpack.c.b16 %v333, %v332
    %v346 = vpack.c.b16 %v335, %v334
    %v347 = vpack.c.b16 %v337, %v336
    %v348 = vpack.c.b16 %v339, %v338
    %v349 = vpack.c.b16 %v341, %v340
    %358 = vmatprep.subr.bf16.mxu0 0
    %359 = vmatpush1.bf16.msra.mxu0 %v342
    %360 = vmatprep.subr.bf16.mxu0 0
    %361 = vmatpush1.bf16.msra.mxu0 %v343
    %362 = vmatprep.subr.bf16.mxu0 0
    %363 = vmatpush1.bf16.msra.mxu0 %v344
    %364 = vmatprep.subr.bf16.mxu0 0
    %365 = vmatpush1.bf16.msra.mxu0 %v345
    %366 = vmatprep.subr.bf16.mxu0 0
    %367 = vmatpush1.bf16.msra.mxu0 %v346
    %368 = vmatprep.subr.bf16.mxu0 0
    %369 = vmatpush1.bf16.msra.mxu0 %v347
    %370 = vmatprep.subr.bf16.mxu0 0
    %371 = vmatpush1.bf16.msra.mxu0 %v348
    %372 = vmatprep.subr.bf16.mxu0 0
    %373 = vmatpush1.bf16.msra.mxu0 %v349
    %374 = vmatprep.subr.bf16.mxu0 0
    %375 = vmatpush1.bf16.msra.mxu0 0
    %376 = vmatprep.subr.bf16.mxu0 0
    %377 = vmatpush1.bf16.msra.mxu0 0
    %378 = vmatprep.subr.bf16.mxu0 0
    %379 = vmatpush1.bf16.msra.mxu0 0
    %380 = vmatprep.subr.bf16.mxu0 0
    %381 = vmatpush1.bf16.msra.mxu0 0
    %382 = vmatprep.subr.bf16.mxu0 0
    %383 = vmatpush1.bf16.msra.mxu0 0
    %384 = vmatprep.subr.bf16.mxu0 0
    %385 = vmatpush1.bf16.msra.mxu0 0
    %386 = vmatprep.subr.bf16.mxu0 0
    %387 = vmatpush1.bf16.msra.mxu0 0
    %388 = vmatprep.subr.bf16.mxu0 0
    %389 = vmatpush1.bf16.msra.mxu0 0
    %390 = vmatprep.mubr.bf16.mxu0 0
    %391 = vmatmul.mubr.bf16.gmra.mrb[0].mxu0 %v286
    %v392 = vpop.f32.mrb[0].mxu0
    %v393 = vadd.f32 %v308, %v392
    %v394 = vpop.f32.mrb[0].mxu0
    %v395 = vpop.f32.mrb[0].mxu0
    %v396 = vpop.f32.mrb[0].mxu0
    %397 = vdwg.mxu0
    %v398 = vld [vmem:[#allocation10] sm:$0xf]
    %v399 = vld [vmem:[#allocation10 + $0x4] sm:$0xf]
    %v400 = vld [vmem:[#allocation10 + $0x8] sm:$0xf]
    %v401 = vld [vmem:[#allocation10 + $0xc] sm:$0xf]
    %v402 = vld [vmem:[#allocation10 + $0x10] sm:$0xf]
    %v403 = vld [vmem:[#allocation10 + $0x14] sm:$0xf]
    %v404 = vld [vmem:[#allocation10 + $0x18] sm:$0xf]
    %v405 = vld [vmem:[#allocation10 + $0x1c] sm:$0xf]
    %v406 = vld [vmem:[#allocation10 + $0x20] sm:$0xf]
    %v407 = vld [vmem:[#allocation10 + $0x24] sm:$0xf]
    %v408 = vld [vmem:[#allocation10 + $0x28] sm:$0xf]
    %v409 = vld [vmem:[#allocation10 + $0x2c] sm:$0xf]
    %v410 = vld [vmem:[#allocation10 + $0x30] sm:$0xf]
    %v411 = vld [vmem:[#allocation10 + $0x34] sm:$0xf]
    %v412 = vld [vmem:[#allocation10 + $0x38] sm:$0xf]
    %v413 = vld [vmem:[#allocation10 + $0x3c] sm:$0xf]
    %v414 = vld [vmem:[%s8] sm:$0x1]
    %v416 = vlaneseq
    %v417 = vshrl.u32 %v416, 7
    %v418 = vsub.s32 0, %v417
    %v419 = vrot.slane %v414, %v418
    %v437 = vunpack.c.l.b16 %v398
    %v438 = vunpack.c.l.b16 %v399
    %v439 = vunpack.c.l.b16 %v400
    %v440 = vunpack.c.l.b16 %v401
    %v441 = vunpack.c.l.b16 %v402
    %v442 = vunpack.c.l.b16 %v403
    %v443 = vunpack.c.l.b16 %v404
    %v444 = vunpack.c.l.b16 %v405
    %v445 = vunpack.c.l.b16 %v406
    %v446 = vunpack.c.l.b16 %v407
    %v447 = vunpack.c.l.b16 %v408
    %v448 = vunpack.c.l.b16 %v409
    %v449 = vunpack.c.l.b16 %v410
    %v450 = vunpack.c.l.b16 %v411
    %v451 = vunpack.c.l.b16 %v412
    %v452 = vunpack.c.l.b16 %v413
    %v453 = vpack.c.b16 %v438, %v437
    %v454 = vpack.c.b16 %v440, %v439
    %v455 = vpack.c.b16 %v442, %v441
    %v456 = vpack.c.b16 %v444, %v443
    %v457 = vpack.c.b16 %v446, %v445
    %v458 = vpack.c.b16 %v448, %v447
    %v459 = vpack.c.b16 %v450, %v449
    %v460 = vpack.c.b16 %v452, %v451
    %469 = vmatprep.subr.bf16.mxu0 0
    %470 = vmatpush1.bf16.msra.mxu0 %v453
    %471 = vmatprep.subr.bf16.mxu0 0
    %472 = vmatpush1.bf16.msra.mxu0 %v454
    %473 = vmatprep.subr.bf16.mxu0 0
    %474 = vmatpush1.bf16.msra.mxu0 %v455
    %475 = vmatprep.subr.bf16.mxu0 0
    %476 = vmatpush1.bf16.msra.mxu0 %v456
    %477 = vmatprep.subr.bf16.mxu0 0
    %478 = vmatpush1.bf16.msra.mxu0 %v457
    %479 = vmatprep.subr.bf16.mxu0 0
    %480 = vmatpush1.bf16.msra.mxu0 %v458
    %481 = vmatprep.subr.bf16.mxu0 0
    %482 = vmatpush1.bf16.msra.mxu0 %v459
    %483 = vmatprep.subr.bf16.mxu0 0
    %484 = vmatpush1.bf16.msra.mxu0 %v460
    %485 = vmatprep.subr.bf16.mxu0 0
    %486 = vmatpush1.bf16.msra.mxu0 0
    %487 = vmatprep.subr.bf16.mxu0 0
    %488 = vmatpush1.bf16.msra.mxu0 0
    %489 = vmatprep.subr.bf16.mxu0 0
    %490 = vmatpush1.bf16.msra.mxu0 0
    %491 = vmatprep.subr.bf16.mxu0 0
    %492 = vmatpush1.bf16.msra.mxu0 0
    %493 = vmatprep.subr.bf16.mxu0 0
    %494 = vmatpush1.bf16.msra.mxu0 0
    %495 = vmatprep.subr.bf16.mxu0 0
    %496 = vmatpush1.bf16.msra.mxu0 0
    %497 = vmatprep.subr.bf16.mxu0 0
    %498 = vmatpush1.bf16.msra.mxu0 0
    %499 = vmatprep.subr.bf16.mxu0 0
    %500 = vmatpush1.bf16.msra.mxu0 0
    %501 = vmatprep.mubr.bf16.mxu0 0
    %502 = vmatmul.mubr.bf16.gmra.mrb[0].mxu0 %v286
    %v503 = vpop.f32.mrb[0].mxu0
    %v504 = vadd.f32 %v419, %v503
    %v505 = vpop.f32.mrb[0].mxu0
    %v506 = vpop.f32.mrb[0].mxu0
    %v507 = vpop.f32.mrb[0].mxu0
    %508 = vdwg.mxu0
    %v509 = vtanh.pop %v504
    %v510 = vadd.f32 %v509, 1.0
    %v511 = vmul.f32 %v510, 6.0
    %v512 = vadd.f32 %v511, -10.0
    %513 = vst [vmem:[#allocation11] sm:$0xff] %v393
    %v514 = vmul.f32 %v512, 1.442695
    %v515 = vpow.pop %v514
    %516 = vst [vmem:[#allocation12] sm:$0xff] %v515
    // Predicated region
    $region58: #{actor_forward.1} parent=1 // pred_check
      _
    $region59: #{actor_forward.1} parent=1 // pred_check_branch
      %518 = sbr.rel (0) target = $region61
    $region60: #{actor_forward.1} parent=1 // pred_region
      %s520 = ssub.s32 128, 128
      %521 = vsyncadd [#allocation4], %s520
      %s523 = sshll.u32 [#allocation11], 4
      %s524 = int_to_ptr.vmem [resolvable:$true] %s523
      %526 = dma.vmem_to_hbm [thread:$0]  %s524, 128, %s9, [#allocation4]
    $region61: #{actor_forward.1} parent=1 // pred_fallthru
      _
    // Predicated region
    $region62: #{actor_forward.1} parent=1 // pred_check
      _
    $region63: #{actor_forward.1} parent=1 // pred_check_branch
      %528 = sbr.rel (0) target = $region65
    $region64: #{actor_forward.1} parent=1 // pred_region
      %s530 = ssub.s32 128, 128
      %531 = vsyncadd [#allocation13], %s530
      %s533 = sshll.u32 [#allocation12], 4
      %s534 = int_to_ptr.vmem [resolvable:$true] %s533
      %536 = dma.vmem_to_hbm [thread:$0]  %s534, 128, %s10, [#allocation13]
    $region65: #{actor_forward.1} parent=1 // pred_fallthru
      _
    // Predicated region
    $region66: #{actor_forward.1} parent=1 // pred_check
      _
    $region67: #{actor_forward.1} parent=1 // pred_check_branch
      %538 = sbr.rel (0) target = $region69
    $region68: #{actor_forward.1} parent=1 // pred_region
      %539 = dma.done [#allocation4], 128
    $region69: #{actor_forward.1} parent=1 // pred_fallthru
      _
    // Predicated region
    $region70: #{actor_forward.1} parent=1 // pred_check
      _
    $region71: #{actor_forward.1} parent=1 // pred_check_branch
      %541 = sbr.rel (0) target = $region73
    $region72: #{actor_forward.1} parent=1 // pred_region
      %542 = dma.done [#allocation13], 128
    $region73: #{actor_forward.1} parent=1 // pred_fallthru
      _
    %543 = vsyncpa [#allocation3], 1
    %544 = vsyncpa [#allocation6], 1
    %545 = vsyncpa [#allocation9], 1
    %546 = vsyncpa [#allocation4], 1
    %547 = vsyncpa [#allocation13], 1

</llo_original>
